<compile_context>
chip_gen: v6e
topology: v6e:2x2x1
jax: 0.10.0
libtpu: 0.0.40
codegen_flags: <defaults>
</compile_context>

<pallas_src>
import functools

import jax
import jax.numpy as jnp
from jax.experimental import pallas as pl
from jax.experimental.pallas import tpu as pltpu


def _make_conv_relu_kernel(K, Cp, OC, Wp, Lw, stride, NB):
    """out_wide = relu(W_fused @ patches + b) for NB images per grid step."""
    wide_len = Lw + (K - 1) * Wp  # covers all kh row offsets for one kw slab

    def kernel(x_ref, w_ref, b_ref, o_ref):
        # x_ref: (NB, Cp, L)        compute dtype, spatially-flattened images
        # w_ref: (OC, K*K*Cp)       compute dtype, rows ordered (kw, kh, c)
        # b_ref: (OC, 1)            f32
        # o_ref: (NB, OC, Lw)       output dtype (lane-dense wide layout)
        w = w_ref[...]
        b = b_ref[...]
        for n in range(NB):                       # static unroll, NB is small
            slabs = []
            if stride == 1:
                # kw-dedup: one unaligned ref load per kw column offset; the K
                # row (kh) shifts are cheap static slices of that loaded slab.
                for kw in range(K):
                    wide = x_ref[n, :, kw:kw + wide_len]          # (Cp, wide_len)
                    for kh in range(K):
                        slabs.append(wide[:, kh * Wp:kh * Wp + Lw])
            else:
                # TODO(synk): wrapper-side column de-interleave to avoid
                # lane-strided loads on the stride>1 path.
                for kw in range(K):
                    for kh in range(K):
                        off = kh * Wp + kw
                        slabs.append(x_ref[n, :, pl.ds(off, Lw, stride=stride)])
            # Single fused contraction: (OC, K*K*Cp) x (K*K*Cp, Lw) on the MXU.
            patches = jnp.concatenate(slabs, axis=0)              # (K*K*Cp, Lw)
            acc = jnp.dot(w, patches, preferred_element_type=jnp.float32)
            acc = acc + b                                          # f32 bias
            o_ref[n] = jnp.maximum(acc, 0.0).astype(o_ref.dtype)  # f32 ReLU

    return kernel


def _choose_images_per_block(N, per_image_step_bytes, budget_bytes=24 << 20):
    """Largest divisor of N that fits the VMEM budget while leaving ~2 grid
    steps when possible (2 parallel steps feed both TensorCores on dual-TC
    chips; fewer, larger steps amortize the ~0.35us/step overhead on v5e/v6e).
    """
    best = 1
    for nb in range(1, N + 1):
        if N % nb:
            continue
        if nb * per_image_step_bytes > budget_bytes and nb > 1:
            break
        best = nb
        if N // nb <= 2:
            break
    return best


def basic_conv2d(x_nchw, weight, bias, *, stride=1, padding=-1,
                 compute_dtype=jnp.float32, images_per_block=None, crop=True):
    """Forward of BasicConv2d: ReLU(Conv2d(x)).

    x_nchw : (N, C, H, W)   float32
    weight : (OC, C, K, K)  float32   (PyTorch Conv2d weight layout)
    bias   : (OC,)          float32
    compute_dtype: operand dtype for the matmul (f32 = PyTorch parity,
                   bf16 = halved HBM bytes on the dominant input stream).
                   Accumulation, bias and ReLU are always f32.
    """
    N, C, H, W = x_nchw.shape
    OC, _, K, _ = weight.shape
    if padding == -1:
        padding = (K - 1) // 2

    OH = (H + 2 * padding - K) // stride + 1
    OW = (W + 2 * padding - K) // stride + 1
    Hp = H + 2 * padding
    Wp = W + 2 * padding
    Lw = OH * Wp                       # "wide" flattened output length per image

    cd_sz = jnp.dtype(compute_dtype).itemsize
    out_sz = jnp.dtype(x_nchw.dtype).itemsize

    # Channel pad to the sublane tile so all concatenated slabs are tile-aligned
    # (zero channels x zero weight rows == no numeric effect). Real nets already
    # have tile-multiple channel counts, so this only pads tiny toy configs.
    sub_tile = max(8, 32 // cd_sz)          # 8 rows for f32, 16 for bf16
    Cp = ((C + sub_tile - 1) // sub_tile) * sub_tile
    KKC = K * K * Cp

    # Flat-offset trick: input flat index for wide slot j and tap (kh,kw) is
    # stride*j + kh*Wp + kw. Pad halo rows so the largest slice stays in bounds
    # (the halo only feeds discarded wide columns and is zero anyway).
    needed = stride * (Lw - 1) + (K - 1) * Wp + (K - 1) + 1
    extra_rows = max(0, -(-(needed - Hp * Wp) // Wp))
    L = (Hp + extra_rows) * Wp

    # One wrapper pass: channel pad + spatial zero-pad + halo rows + operand
    # cast, all fused into a single pad. Input stays NCHW end-to-end.
    x_p = jnp.pad(x_nchw.astype(compute_dtype),
                  ((0, 0), (0, Cp - C),
                   (padding, padding + extra_rows),
                   (padding, padding)))
    x_flat = x_p.reshape(N, Cp, L)

    # weight (OC, C, kh, kw) -> (OC, kw, kh, Cp) -> (OC, K*K*Cp): row order
    # matches the kernel's slab order (kw outer, kh inner, channel innermost).
    w_p = weight if Cp == C else jnp.pad(weight, ((0, 0), (0, Cp - C), (0, 0), (0, 0)))
    w_fused = jnp.transpose(w_p, (0, 3, 2, 1)).reshape(OC, KKC).astype(compute_dtype)
    b_r = bias.astype(jnp.float32).reshape(OC, 1)

    # Per-step footprint (double-buffered image block in + wide block out).
    per_image_step_bytes = 2 * (Cp * L * cd_sz + OC * Lw * out_sz)
    if images_per_block is None:
        images_per_block = _choose_images_per_block(N, per_image_step_bytes)
    NB = images_per_block
    assert N % NB == 0, (N, NB)
    num_blocks = N // NB

    kernel = _make_conv_relu_kernel(K, Cp, OC, Wp, Lw, stride, NB)

    # Advisory cost estimate over the work the kernel actually does (wide OH*Wp
    # positions); bytes_accessed is kernel-only HBM traffic (the wrapper pad
    # and the final compaction slice are consistently excluded).
    flops = 2 * N * Lw * KKC * OC
    bytes_accessed = (x_flat.size * cd_sz + w_fused.size * cd_sz
                      + b_r.size * 4 + N * OC * Lw * out_sz)

    step_bytes = (NB * per_image_step_bytes
                  + 2 * (w_fused.size * cd_sz + b_r.size * 4)
                  + KKC * Lw * cd_sz)           # patch assembly working set
    vmem_limit = int(min(32 * 1024 * 1024, max(4 * 1024 * 1024, 4 * step_bytes)))

    out_wide = pl.pallas_call(
        kernel,
        out_shape=jax.ShapeDtypeStruct((N, OC, Lw), x_nchw.dtype),
        grid=(num_blocks,),
        in_specs=[
            pl.BlockSpec((NB, Cp, L), lambda b: (b, 0, 0)),     # image block
            pl.BlockSpec((OC, KKC), lambda b: (0, 0)),          # resident weight
            pl.BlockSpec((OC, 1), lambda b: (0, 0)),            # bias
        ],
        out_specs=pl.BlockSpec((NB, OC, Lw), lambda b: (b, 0, 0)),
        compiler_params=pltpu.CompilerParams(
            dimension_semantics=("parallel",),
            vmem_limit_bytes=vmem_limit),
        cost_estimate=pl.CostEstimate(
            flops=flops, transcendentals=0, bytes_accessed=bytes_accessed),
    )(x_flat, w_fused, b_r)

    # (N, OC, OH*Wp) -> (N, OC, OH, Wp) is a free reshape. Dropping the K-1
    # garbage columns is one extra XLA copy of the output; pass crop=False to
    # accept the wide layout and skip it (tiny OW per-row stores would be
    # lane-masked and worse, so the kernel keeps the lane-dense wide store).
    out_wide4 = out_wide.reshape(N, OC, OH, Wp)
    if not crop:
        return out_wide4
    return out_wide4[:, :, :, :OW]


def _reference(x_nchw, weight, bias, stride, padding):
    """Pure-JAX f32 reference (lax conv) for correctness check."""
    y = jax.lax.conv_general_dilated(
        x_nchw, weight,
        window_strides=(stride, stride),
        padding=((padding, padding), (padding, padding)),
        dimension_numbers=("NCHW", "OIHW", "NCHW"))
    y = y + bias.reshape(1, -1, 1, 1)
    return jnp.maximum(y, 0.0)


if __name__ == "__main__":
    # module config: in_channels=4, out_channels=8, kernel_size=3,
    # stride=1, padding=(3-1)//2=1, bias=True
    in_channels, out_channels, kernel_size, stride = 4, 8, 3, 1
    padding = (kernel_size - 1) // 2

    key = jax.random.PRNGKey(0)
    kx, kwt, kb = jax.random.split(key, 3)
    x = jax.random.normal(kx, (2, in_channels, 16, 16), dtype=jnp.float32)
    # deterministic, PyTorch-like uniform init scale
    fan_in = in_channels * kernel_size * kernel_size
    bound = 1.0 / (fan_in ** 0.5)
    weight = jax.random.uniform(
        kwt, (out_channels, in_channels, kernel_size, kernel_size),
        minval=-bound, maxval=bound, dtype=jnp.float32)
    bias = jax.random.uniform(
        kb, (out_channels,), minval=-bound, maxval=bound, dtype=jnp.float32)

    y_ref = _reference(x, weight, bias, stride, padding)

    # Default f32-operand path (PyTorch parity).
    run_f32 = jax.jit(functools.partial(
        basic_conv2d, stride=stride, padding=padding, compute_dtype=jnp.float32))
    y32 = run_f32(x, weight, bias)
    jax.block_until_ready(y32)
    assert y32.shape == (2, out_channels, 16, 16), y32.shape
    err32 = float(jnp.max(jnp.abs(y32 - y_ref)))
    assert jnp.allclose(y32, y_ref, atol=1e-2, rtol=1e-2), err32

    # bf16-operand / f32-accumulate path (bandwidth-optimized, looser tolerance).
    run_bf16 = jax.jit(functools.partial(
        basic_conv2d, stride=stride, padding=padding, compute_dtype=jnp.bfloat16))
    y16 = run_bf16(x, weight, bias)
    jax.block_until_ready(y16)
    assert y16.shape == (2, out_channels, 16, 16), y16.shape
    err16 = float(jnp.max(jnp.abs(y16 - y_ref)))
    assert jnp.allclose(y16, y_ref, atol=5e-2, rtol=5e-2), err16

    print("KERNEL_OK")
</pallas_src>

<mosaic_0001>
module attributes {stable_mosaic.version = 11 : i64} {
  func.func @kernel(%arg0: i32, %arg1: memref<1x8x342xf32, #tpu.memory_space<vmem>>, %arg2: memref<8x72xf32, #tpu.memory_space<vmem>>, %arg3: memref<8x1xf32, #tpu.memory_space<vmem>>, %arg4: memref<1x8x288xf32, #tpu.memory_space<vmem>>) attributes {dimension_semantics = [#tpu.dimension_semantics<parallel>], iteration_bounds = array<i64: 2>, scalar_prefetch = 0 : i64, scratch_operands = 0 : i64, tpu.core_type = #tpu.core_type<tc>, window_params = [{transform_indices = @transform_0, window_bounds = array<i64: 1, 8, 342>}, {pipeline_mode = #tpu.pipeline_mode<synchronous>, transform_indices = @transform_1, window_bounds = array<i64: 8, 72>}, {pipeline_mode = #tpu.pipeline_mode<synchronous>, transform_indices = @transform_2, window_bounds = array<i64: 8, 1>}, {transform_indices = @transform_3, window_bounds = array<i64: 1, 8, 288>}]} {
    %c0 = arith.constant 0 : index
    %c0_0 = arith.constant 0 : index
    %0 = vector.load %arg2[%c0, %c0_0] : memref<8x72xf32, #tpu.memory_space<vmem>>, vector<8x72xf32>
    %c0_1 = arith.constant 0 : index
    %c0_2 = arith.constant 0 : index
    %1 = vector.load %arg3[%c0_1, %c0_2] : memref<8x1xf32, #tpu.memory_space<vmem>>, vector<8x1xf32>
    %c0_3 = arith.constant 0 : index
    %c0_4 = arith.constant 0 : index
    %c0_5 = arith.constant 0 : index
    %2 = vector.load %arg1[%c0_3, %c0_4, %c0_5] : memref<1x8x342xf32, #tpu.memory_space<vmem>>, vector<1x8x324xf32>
    %3 = vector.shape_cast %2 : vector<1x8x324xf32> to vector<8x324xf32>
    %4 = vector.extract_strided_slice %3 {offsets = [0, 0], sizes = [8, 288], strides = [1, 1]} : vector<8x324xf32> to vector<8x288xf32>
    %5 = vector.extract_strided_slice %3 {offsets = [0, 18], sizes = [8, 288], strides = [1, 1]} : vector<8x324xf32> to vector<8x288xf32>
    %6 = vector.extract_strided_slice %3 {offsets = [0, 36], sizes = [8, 288], strides = [1, 1]} : vector<8x324xf32> to vector<8x288xf32>
    %c0_6 = arith.constant 0 : index
    %c0_7 = arith.constant 0 : index
    %c1 = arith.constant 1 : index
    %7 = vector.load %arg1[%c0_6, %c0_7, %c1] : memref<1x8x342xf32, #tpu.memory_space<vmem>>, vector<1x8x324xf32>
    %8 = vector.shape_cast %7 : vector<1x8x324xf32> to vector<8x324xf32>
    %9 = vector.extract_strided_slice %8 {offsets = [0, 0], sizes = [8, 288], strides = [1, 1]} : vector<8x324xf32> to vector<8x288xf32>
    %10 = vector.extract_strided_slice %8 {offsets = [0, 18], sizes = [8, 288], strides = [1, 1]} : vector<8x324xf32> to vector<8x288xf32>
    %11 = vector.extract_strided_slice %8 {offsets = [0, 36], sizes = [8, 288], strides = [1, 1]} : vector<8x324xf32> to vector<8x288xf32>
    %c0_8 = arith.constant 0 : index
    %c0_9 = arith.constant 0 : index
    %c2 = arith.constant 2 : index
    %12 = vector.load %arg1[%c0_8, %c0_9, %c2] : memref<1x8x342xf32, #tpu.memory_space<vmem>>, vector<1x8x324xf32>
    %13 = vector.shape_cast %12 : vector<1x8x324xf32> to vector<8x324xf32>
    %14 = vector.extract_strided_slice %13 {offsets = [0, 0], sizes = [8, 288], strides = [1, 1]} : vector<8x324xf32> to vector<8x288xf32>
    %15 = vector.extract_strided_slice %13 {offsets = [0, 18], sizes = [8, 288], strides = [1, 1]} : vector<8x324xf32> to vector<8x288xf32>
    %16 = vector.extract_strided_slice %13 {offsets = [0, 36], sizes = [8, 288], strides = [1, 1]} : vector<8x324xf32> to vector<8x288xf32>
    %17 = tpu.concatenate %4, %5, %6, %9, %10, %11, %14, %15, %16 in 0 : vector<8x288xf32>, vector<8x288xf32>, vector<8x288xf32>, vector<8x288xf32>, vector<8x288xf32>, vector<8x288xf32>, vector<8x288xf32>, vector<8x288xf32>, vector<8x288xf32> -> vector<72x288xf32>
    %cst = arith.constant dense<0.000000e+00> : vector<8x288xf32>
    %18 = tpu.matmul %0, %17, %cst {dimension_numbers = #tpu.dot_dimension_numbers<[1], [0], [0], [1], [0, 0, 1, 1], [], []>} : vector<8x72xf32>, vector<72x288xf32>, vector<8x288xf32> -> vector<8x288xf32>
    %19 = vector.broadcast %1 : vector<8x1xf32> to vector<8x288xf32>
    %20 = arith.addf %18, %19 : vector<8x288xf32>
    %cst_10 = arith.constant 0.000000e+00 : f32
    %21 = vector.broadcast %cst_10 : f32 to vector<8x288xf32>
    %22 = arith.maximumf %20, %21 : vector<8x288xf32>
    %c0_11 = arith.constant 0 : index
    %c0_12 = arith.constant 0 : index
    %c0_13 = arith.constant 0 : index
    %23 = vector.load %arg4[%c0_11, %c0_12, %c0_13] : memref<1x8x288xf32, #tpu.memory_space<vmem>>, vector<1x8x288xf32>
    %24 = vector.shape_cast %23 : vector<1x8x288xf32> to vector<8x288xf32>
    %25 = vector.shape_cast %22 : vector<8x288xf32> to vector<1x8x288xf32>
    tpu.vector_store %arg4[%c0_11, %c0_12, %c0_13], %25 {strides = array<i32>} : memref<1x8x288xf32, #tpu.memory_space<vmem>>, vector<1x8x288xf32>,
    return
  }
  func.func @transform_0(%arg0: i32) -> (i32, i32, i32) {
    %c0_i32 = arith.constant 0 : i32
    %c0_i32_0 = arith.constant 0 : i32
    %c0_i32_1 = arith.constant 0 : i32
    return %arg0, %c0_i32, %c0_i32_0 : i32, i32, i32
  }
  func.func @transform_1(%arg0: i32) -> (i32, i32) {
    %c0_i32 = arith.constant 0 : i32
    %c0_i32_0 = arith.constant 0 : i32
    %c0_i32_1 = arith.constant 0 : i32
    return %c0_i32, %c0_i32_0 : i32, i32
  }
  func.func @transform_2(%arg0: i32) -> (i32, i32) {
    %c0_i32 = arith.constant 0 : i32
    %c0_i32_0 = arith.constant 0 : i32
    %c0_i32_1 = arith.constant 0 : i32
    return %c0_i32, %c0_i32_0 : i32, i32
  }
  func.func @transform_3(%arg0: i32) -> (i32, i32, i32) {
    %c0_i32 = arith.constant 0 : i32
    %c0_i32_0 = arith.constant 0 : i32
    %c0_i32_1 = arith.constant 0 : i32
    return %arg0, %c0_i32, %c0_i32_0 : i32, i32, i32
  }
}

</mosaic_0001>

<llo_original>
// kernel: basic_conv2d.1
$region0: #{basic_conv2d.1}
  #allocation0 [shape = 'u32[]', space=smem, size = 0x4, offset = 0x4, fixed_abs, tag = 'smem constant byte address 0x4 - core index']
  #allocation1 [shape = 'u32[144,128]{1,0:T(1,128)}', space=vmem, size = 0x12000, scoped, tag = 'internal scratch']
  %s0 = inlined_call_operand.vmem [shape: f32[2,8,342], index: 0, kind: input, shape index: {}]
  %s1 = inlined_call_operand.vmem [shape: f32[8,72], index: 1, kind: input, shape index: {}]
  %s2 = inlined_call_operand.vmem [shape: f32[8,1], index: 2, kind: input, shape index: {}]
  %s3 = inlined_call_operand.vmem [shape: f32[2,8,288], index: 3, kind: output, shape index: {}]
  %s4 = sld [smem:[#allocation0]]
  $region45: #{basic_conv2d.1} parent=0
    _
  %s6 = ssub.s32 1, %s4
  %s7 = scalar_select 0, %s6, %s4
  loop: start=0, step=1, limit=4
  $region2: #{basic_conv2d.1} parent=0 // loop_pre_header
    _
  $region3: #{basic_conv2d.1} parent=0 // loop_header
    %s9 = sphi 0, %s13
    %p10 = scmp.ge.s32.totalorder %s9, 4
    %s19 = sphi 0, %s21
    %s22 = sphi 0, %s19
    %s23 = sphi 0, %s22
    %s39 = sphi 0, %s23
    %s43 = sphi 0, %s43
    %s45 = sphi 0, %s43
    %s46 = sphi 0, %s45
    %s60 = sphi 0, %s46
    %s64 = sphi 0, %s64
    %s66 = sphi 0, %s64
    %s67 = sphi 0, %s66
    %s81 = sphi 0, %s67
    %s87 = sphi 0, %s89
    %s90 = sphi 0, %s87
    %s91 = sphi 0, %s90
    %s107 = sphi 0, %s91
  $region4: #{basic_conv2d.1} parent=0 // loop_header_branch
    %12 = sbr.rel (%p10) target = $region8
  $region5: #{basic_conv2d.1} parent=0 // loop_body
    %s14 = ssub.s32 %s9, 1
    %s15 = ssub.s32 %s9, 2
    %s16 = sadd.s32 %s9, 1
    %s17 = ssub.s32 %s9, %s16
    %p18 = scmp.eq.s32.totalorder %s17, 0
    %s20 = sadd.s32 %s19, 1
    %s21 = scalar_select %p18, %s19, %s20
    %p24 = pneg %p18
    %p25 = scmp.eq.s32.totalorder %s9, 1
    %p26 = por %p24, %p25
    %p27 = scmp.ne.s32.totalorder %s19, %s22
    %p28 = scmp.eq.s32.totalorder %s9, 0
    %p29 = por %p27, %p28
    %p30 = scmp.ne.s32.totalorder %s19, %s22
    %p31 = scmp.eq.s32.totalorder %s14, 1
    %p32 = por %p30, %p31
    %p33 = scmp.ne.s32.totalorder %s22, %s23
    %p34 = scmp.eq.s32.totalorder %s14, 0
    %p35 = por %p33, %p34
    %p36 = scmp.ne.s32.totalorder %s22, %s23
    %p37 = scmp.eq.s32.totalorder %s15, 1
    %p38 = por %p36, %p37
    %p40 = scmp.ne.s32.totalorder %s23, %s39
    %p41 = scmp.eq.s32.totalorder %s15, 0
    %p42 = por %p40, %p41
    %s44 = sadd.s32 %s43, 1
    %p47 = scmp.eq.s32.totalorder %s9, 1
    %p48 = scmp.ne.s32.totalorder %s43, %s45
    %p49 = scmp.eq.s32.totalorder %s9, 0
    %p50 = por %p48, %p49
    %p51 = scmp.ne.s32.totalorder %s43, %s45
    %p52 = scmp.eq.s32.totalorder %s14, 1
    %p53 = por %p51, %p52
    %p54 = scmp.ne.s32.totalorder %s45, %s46
    %p55 = scmp.eq.s32.totalorder %s14, 0
    %p56 = por %p54, %p55
    %p57 = scmp.ne.s32.totalorder %s45, %s46
    %p58 = scmp.eq.s32.totalorder %s15, 1
    %p59 = por %p57, %p58
    %p61 = scmp.ne.s32.totalorder %s46, %s60
    %p62 = scmp.eq.s32.totalorder %s15, 0
    %p63 = por %p61, %p62
    %s65 = sadd.s32 %s64, 1
    %p68 = scmp.eq.s32.totalorder %s9, 1
    %p69 = scmp.ne.s32.totalorder %s64, %s66
    %p70 = scmp.eq.s32.totalorder %s9, 0
    %p71 = por %p69, %p70
    %p72 = scmp.ne.s32.totalorder %s64, %s66
    %p73 = scmp.eq.s32.totalorder %s14, 1
    %p74 = por %p72, %p73
    %p75 = scmp.ne.s32.totalorder %s66, %s67
    %p76 = scmp.eq.s32.totalorder %s14, 0
    %p77 = por %p75, %p76
    %p78 = scmp.ne.s32.totalorder %s66, %s67
    %p79 = scmp.eq.s32.totalorder %s15, 1
    %p80 = por %p78, %p79
    %p82 = scmp.ne.s32.totalorder %s67, %s81
    %p83 = scmp.eq.s32.totalorder %s15, 0
    %p84 = por %p82, %p83
    %s85 = ssub.s32 %s9, %s16
    %p86 = scmp.eq.s32.totalorder %s85, 0
    %s88 = sadd.s32 %s87, 1
    %s89 = scalar_select %p86, %s87, %s88
    %p92 = pneg %p86
    %p93 = scmp.eq.s32.totalorder %s9, 1
    %p94 = por %p92, %p93
    %p95 = scmp.ne.s32.totalorder %s87, %s90
    %p96 = scmp.eq.s32.totalorder %s9, 0
    %p97 = por %p95, %p96
    %p98 = scmp.ne.s32.totalorder %s87, %s90
    %p99 = scmp.eq.s32.totalorder %s14, 1
    %p100 = por %p98, %p99
    %p101 = scmp.ne.s32.totalorder %s90, %s91
    %p102 = scmp.eq.s32.totalorder %s14, 0
    %p103 = por %p101, %p102
    %p104 = scmp.ne.s32.totalorder %s90, %s91
    %p105 = scmp.eq.s32.totalorder %s15, 1
    %p106 = por %p104, %p105
    %p108 = scmp.ne.s32.totalorder %s91, %s107
    %p109 = scmp.eq.s32.totalorder %s15, 0
    %p110 = por %p108, %p109
    %p111 = scmp.le.s32.totalorder 1, %s9
    %p112 = scmp.lt.s32.totalorder %s9, 3
    %p113 = pnand %p111, %p112
    %p114 = pneg %p113
    // Predicated region
    $region9: #{basic_conv2d.1} parent=5 // pred_check
      _
    $region10: #{basic_conv2d.1} parent=5 // pred_check_branch
      %116 = sbr.rel (%p113) target = $region12
    $region11: #{basic_conv2d.1} parent=5 // pred_region
      %s117 = ssub.s32 %s9, 1
      // Predicated region
      $region13: #{basic_conv2d.1} parent=11 // pred_check
        %p118 = pneg %p56
      $region14: #{basic_conv2d.1} parent=11 // pred_check_branch
        %120 = sbr.rel (%p118) target = $region16
      $region15: #{basic_conv2d.1} parent=11 // pred_region
        _
      $region16: #{basic_conv2d.1} parent=11 // pred_fallthru
        _
      // Predicated region
      $region17: #{basic_conv2d.1} parent=11 // pred_check
        %p121 = pneg %p77
      $region18: #{basic_conv2d.1} parent=11 // pred_check_branch
        %123 = sbr.rel (%p121) target = $region20
      $region19: #{basic_conv2d.1} parent=11 // pred_region
        _
      $region20: #{basic_conv2d.1} parent=11 // pred_fallthru
        _
    $region12: #{basic_conv2d.1} parent=5 // pred_fallthru
      _
    %p124 = scmp.lt.s32.totalorder %s9, 2
    // Predicated region
    $region21: #{basic_conv2d.1} parent=5 // pred_check
      %p125 = pneg %p124
    $region22: #{basic_conv2d.1} parent=5 // pred_check_branch
      %127 = sbr.rel (%p125) target = $region24
    $region23: #{basic_conv2d.1} parent=5 // pred_region
      // Predicated region
      $region25: #{basic_conv2d.1} parent=23 // pred_check
        %p128 = pneg %p29
      $region26: #{basic_conv2d.1} parent=23 // pred_check_branch
        %130 = sbr.rel (%p128) target = $region28
      $region27: #{basic_conv2d.1} parent=23 // pred_region
        %p131 = scmp.lt.s32.totalorder %s9, 1
        %s132 = scalar_select %p131, %s9, 1
        %s133 = smul.addr %s132, 3
        %s134 = smul.addr %s133, 8
        %s135 = scalar_lea.vmem %s0, %s134
      $region28: #{basic_conv2d.1} parent=23 // pred_fallthru
        _
    $region24: #{basic_conv2d.1} parent=5 // pred_fallthru
      _
    %p136 = scmp.le.s32.totalorder 1, %s9
    %p137 = scmp.lt.s32.totalorder %s9, 3
    %p138 = pnand %p136, %p137
    %p139 = pneg %p138
    // Predicated region
    $region29: #{basic_conv2d.1} parent=5 // pred_check
      _
    $region30: #{basic_conv2d.1} parent=5 // pred_check_branch
      %141 = sbr.rel (%p138) target = $region32
    $region31: #{basic_conv2d.1} parent=5 // pred_region
      %s142 = ssub.s32 %s9, 1
      %p143 = scmp.lt.s32.totalorder %s14, 1
      %s144 = scalar_select %p143, %s14, 1
      %s145 = smul.addr %s144, 3
      %s146 = smul.addr %s145, 8
      %s147 = scalar_lea.vmem %s0, %s146
      %p148 = pneg %p35
      %p149 = pneg %p32
      %p150 = pneg %p56
      %p151 = pneg %p53
      %p152 = pneg %p77
      %p153 = pneg %p74
      %p154 = pneg %p103
      %p155 = pneg %p100
      %p156 = scmp.lt.s32.totalorder %s14, 1
      %s157 = scalar_select %p156, %s14, 1
      %s158 = smul.addr %s157, 3
      %s159 = smul.addr %s158, 8
      %s160 = scalar_lea.vmem %s3, %s159
      %p161 = scmp.lt.s32.totalorder %s14, 1
      %s162 = scalar_select %p161, %s14, 1
      %s163 = smul.addr %s162, 3
      %s164 = smul.addr %s163, 8
      %s165 = scalar_lea.vmem %s0, %s164
      %p166 = scmp.lt.s32.totalorder %s14, 1
      %s167 = scalar_select %p166, %s14, 1
      %s168 = smul.addr %s167, 3
      %s169 = smul.addr %s168, 8
      %s170 = scalar_lea.vmem %s3, %s169
      %v171 = vld [vmem:[%s1] sm:$0xff]
      %v172 = vld [vmem:[%s2] sm:$0xff]
      %v173 = vld [vmem:[%s165] sm:$0xff]
      %v174 = vld [vmem:[%s165 + $0x8] sm:$0xff]
      %v175 = vld [vmem:[%s165 + $0x10] sm:$0xff]
      %179 = vrot.lane.b32.xlu0 %v173, 110
      %v180 = vpop.permute.xlu0 %179
      %181 = vrot.lane.b32.xlu0 %v174, 110
      %v182 = vpop.permute.xlu0 %181
      %183 = vrot.lane.b32.xlu0 %v175, 110
      %v184 = vpop.permute.xlu0 %183
      %vm185 = vcmask 900096
      %v186 = vsel %vm185, %v180, %v182
      %v187 = vsel %vm185, %v182, %v184
      %191 = vrot.lane.b32.xlu0 %v173, 92
      %v192 = vpop.permute.xlu0 %191
      %193 = vrot.lane.b32.xlu0 %v174, 92
      %v194 = vpop.permute.xlu0 %193
      %195 = vrot.lane.b32.xlu0 %v175, 92
      %v196 = vpop.permute.xlu0 %195
      %vm197 = vcmask 752640
      %v198 = vsel %vm197, %v192, %v194
      %v199 = vsel %vm197, %v194, %v196
      %203 = vrot.lane.b32.xlu0 %v173, 127
      %v204 = vpop.permute.xlu0 %203
      %205 = vrot.lane.b32.xlu0 %v174, 127
      %v206 = vpop.permute.xlu0 %205
      %207 = vrot.lane.b32.xlu0 %v175, 127
      %v208 = vpop.permute.xlu0 %207
      %vm209 = vcmask 1039360
      %v210 = vsel %vm209, %v204, %v206
      %v211 = vsel %vm209, %v206, %v208
      %215 = vrot.lane.b32.xlu0 %v173, 109
      %v216 = vpop.permute.xlu0 %215
      %217 = vrot.lane.b32.xlu0 %v174, 109
      %v218 = vpop.permute.xlu0 %217
      %219 = vrot.lane.b32.xlu0 %v175, 109
      %v220 = vpop.permute.xlu0 %219
      %vm221 = vcmask 891904
      %v222 = vsel %vm221, %v216, %v218
      %v223 = vsel %vm221, %v218, %v220
      %227 = vrot.lane.b32.xlu0 %v173, 91
      %v228 = vpop.permute.xlu0 %227
      %229 = vrot.lane.b32.xlu0 %v174, 91
      %v230 = vpop.permute.xlu0 %229
      %231 = vrot.lane.b32.xlu0 %v175, 91
      %v232 = vpop.permute.xlu0 %231
      %vm233 = vcmask 744448
      %v234 = vsel %vm233, %v228, %v230
      %v235 = vsel %vm233, %v230, %v232
      %239 = vrot.lane.b32.xlu0 %v173, 126
      %v240 = vpop.permute.xlu0 %239
      %241 = vrot.lane.b32.xlu0 %v174, 126
      %v242 = vpop.permute.xlu0 %241
      %243 = vrot.lane.b32.xlu0 %v175, 126
      %v244 = vpop.permute.xlu0 %243
      %vm245 = vcmask 1031168
      %v246 = vsel %vm245, %v240, %v242
      %v247 = vsel %vm245, %v242, %v244
      %251 = vrot.lane.b32.xlu0 %v173, 108
      %v252 = vpop.permute.xlu0 %251
      %253 = vrot.lane.b32.xlu0 %v174, 108
      %v254 = vpop.permute.xlu0 %253
      %255 = vrot.lane.b32.xlu0 %v175, 108
      %v256 = vpop.permute.xlu0 %255
      %vm257 = vcmask 883712
      %v258 = vsel %vm257, %v252, %v254
      %v259 = vsel %vm257, %v254, %v256
      %263 = vrot.lane.b32.xlu0 %v173, 90
      %v264 = vpop.permute.xlu0 %263
      %265 = vrot.lane.b32.xlu0 %v174, 90
      %v266 = vpop.permute.xlu0 %265
      %267 = vrot.lane.b32.xlu0 %v175, 90
      %v268 = vpop.permute.xlu0 %267
      %vm269 = vcmask 736256
      %v270 = vsel %vm269, %v264, %v266
      %v271 = vsel %vm269, %v266, %v268
      %276 = vset.pattern.permute.xlu0 0
      %277 = vperm.xlu0 %276, %v172
      %v278 = vpop.permute.xlu0 %277
      %vm280 = vcmask 588800
      %v282 = vsel %vm280, %v171, 0
      %284 = vmatprep.subr.mxu0 0.0
      %285 = vmatpush1.msra.mxu0 0.0
      %286 = vmatprep.subr.mxu0 0.0
      %287 = vmatpush1.msra.mxu0 0.0
      %288 = vmatprep.subr.mxu0 0.0
      %289 = vmatpush1.msra.mxu0 0.0
      %290 = vmatprep.subr.mxu0 0.0
      %291 = vmatpush1.msra.mxu0 0.0
      %292 = vmatprep.subr.mxu0 0.0
      %293 = vmatpush1.msra.mxu0 0.0
      %294 = vmatprep.subr.mxu0 0.0
      %295 = vmatpush1.msra.mxu0 0.0
      %296 = vmatprep.subr.mxu0 0.0
      %297 = vmatpush1.msra.mxu0 0.0
      %298 = vmatprep.subr.mxu0 %v271
      %299 = vmatpush1.msra.mxu0 %v270
      %300 = vmatprep.subr.mxu0 %v259
      %301 = vmatpush1.msra.mxu0 %v258
      %302 = vmatprep.subr.mxu0 %v247
      %303 = vmatpush1.msra.mxu0 %v246
      %304 = vmatprep.subr.mxu0 %v235
      %305 = vmatpush1.msra.mxu0 %v234
      %306 = vmatprep.subr.mxu0 %v223
      %307 = vmatpush1.msra.mxu0 %v222
      %308 = vmatprep.subr.mxu0 %v211
      %309 = vmatpush1.msra.mxu0 %v210
      %310 = vmatprep.subr.mxu0 %v199
      %311 = vmatpush1.msra.mxu0 %v198
      %312 = vmatprep.subr.mxu0 %v187
      %313 = vmatpush1.msra.mxu0 %v186
      %314 = vmatprep.subr.mxu0 %v174
      %315 = vmatpush1.msra.mxu0 %v173
      %316 = vmatprep.subr.mxu0 0.0
      %317 = vmatpush2.msra.mxu0 0.0
      %318 = vmatprep.subr.mxu0 0.0
      %319 = vmatpush2.msra.mxu0 0.0
      %320 = vmatprep.subr.mxu0 0.0
      %321 = vmatpush2.msra.mxu0 0.0
      %322 = vmatprep.subr.mxu0 0.0
      %323 = vmatpush2.msra.mxu0 0.0
      %324 = vmatprep.subr.mxu0 0.0
      %325 = vmatpush2.msra.mxu0 0.0
      %326 = vmatprep.subr.mxu0 0.0
      %327 = vmatpush2.msra.mxu0 0.0
      %328 = vmatprep.subr.mxu0 0.0
      %329 = vmatpush2.msra.mxu0 0.0
      %330 = vmatprep.subr.mxu0 0.0
      %331 = vmatpush2.msra.mxu0 0.0
      %332 = vmatprep.subr.mxu0 0.0
      %333 = vmatpush2.msra.mxu0 0.0
      %334 = vmatprep.subr.mxu0 0.0
      %335 = vmatpush2.msra.mxu0 0.0
      %336 = vmatprep.subr.mxu0 0.0
      %337 = vmatpush2.msra.mxu0 0.0
      %338 = vmatprep.subr.mxu0 0.0
      %339 = vmatpush2.msra.mxu0 0.0
      %340 = vmatprep.subr.mxu0 0.0
      %341 = vmatpush2.msra.mxu0 0.0
      %342 = vmatprep.subr.mxu0 0.0
      %343 = vmatpush2.msra.mxu0 0.0
      %344 = vmatprep.subr.mxu0 0.0
      %345 = vmatpush2.msra.mxu0 0.0
      %346 = vmatprep.subr.mxu0 0.0
      %347 = vmatpush2.msra.mxu0 0.0
      %348 = vmatprep.mubr.f32.mxu0 0.0
      %349 = vmatmul.mubr.f32.gmra.mxu0 %v282
      %v350 = vpop.f32.mrf.mxu0
      %v351 = vadd.f32 %v278, %v350
      %v352 = vpop.f32.mrf.mxu0
      %v353 = vadd.f32 %v278, %v352
      %354 = vdwg.mxu0
      %355 = vmatprep.subr.mxu0 0.0
      %356 = vmatpush1.msra.mxu0 0.0
      %357 = vmatprep.subr.mxu0 0.0
      %358 = vmatpush1.msra.mxu0 0.0
      %359 = vmatprep.subr.mxu0 0.0
      %360 = vmatpush1.msra.mxu0 0.0
      %361 = vmatprep.subr.mxu0 0.0
      %362 = vmatpush1.msra.mxu0 0.0
      %363 = vmatprep.subr.mxu0 0.0
      %364 = vmatpush1.msra.mxu0 0.0
      %365 = vmatprep.subr.mxu0 0.0
      %366 = vmatpush1.msra.mxu0 0.0
      %367 = vmatprep.subr.mxu0 0.0
      %368 = vmatpush1.msra.mxu0 0.0
      %369 = vmatprep.subr.mxu0 0.0
      %370 = vmatpush1.msra.mxu0 %v268
      %371 = vmatprep.subr.mxu0 0.0
      %372 = vmatpush1.msra.mxu0 %v256
      %373 = vmatprep.subr.mxu0 0.0
      %374 = vmatpush1.msra.mxu0 %v244
      %375 = vmatprep.subr.mxu0 0.0
      %376 = vmatpush1.msra.mxu0 %v232
      %377 = vmatprep.subr.mxu0 0.0
      %378 = vmatpush1.msra.mxu0 %v220
      %379 = vmatprep.subr.mxu0 0.0
      %380 = vmatpush1.msra.mxu0 %v208
      %381 = vmatprep.subr.mxu0 0.0
      %382 = vmatpush1.msra.mxu0 %v196
      %383 = vmatprep.subr.mxu0 0.0
      %384 = vmatpush1.msra.mxu0 %v184
      %385 = vmatprep.subr.mxu0 0.0
      %386 = vmatpush1.msra.mxu0 %v175
      %387 = vmatprep.subr.mxu0 0.0
      %388 = vmatpush2.msra.mxu0 0.0
      %389 = vmatprep.subr.mxu0 0.0
      %390 = vmatpush2.msra.mxu0 0.0
      %391 = vmatprep.subr.mxu0 0.0
      %392 = vmatpush2.msra.mxu0 0.0
      %393 = vmatprep.subr.mxu0 0.0
      %394 = vmatpush2.msra.mxu0 0.0
      %395 = vmatprep.subr.mxu0 0.0
      %396 = vmatpush2.msra.mxu0 0.0
      %397 = vmatprep.subr.mxu0 0.0
      %398 = vmatpush2.msra.mxu0 0.0
      %399 = vmatprep.subr.mxu0 0.0
      %400 = vmatpush2.msra.mxu0 0.0
      %401 = vmatprep.subr.mxu0 0.0
      %402 = vmatpush2.msra.mxu0 0.0
      %403 = vmatprep.subr.mxu0 0.0
      %404 = vmatpush2.msra.mxu0 0.0
      %405 = vmatprep.subr.mxu0 0.0
      %406 = vmatpush2.msra.mxu0 0.0
      %407 = vmatprep.subr.mxu0 0.0
      %408 = vmatpush2.msra.mxu0 0.0
      %409 = vmatprep.subr.mxu0 0.0
      %410 = vmatpush2.msra.mxu0 0.0
      %411 = vmatprep.subr.mxu0 0.0
      %412 = vmatpush2.msra.mxu0 0.0
      %413 = vmatprep.subr.mxu0 0.0
      %414 = vmatpush2.msra.mxu0 0.0
      %415 = vmatprep.subr.mxu0 0.0
      %416 = vmatpush2.msra.mxu0 0.0
      %417 = vmatprep.subr.mxu0 0.0
      %418 = vmatpush2.msra.mxu0 0.0
      %419 = vmatprep.mubr.f32.mxu0 0.0
      %420 = vmatmul.mubr.f32.gmra.mxu0 %v282
      %v421 = vpop.f32.mrf.mxu0
      %v422 = vadd.f32 %v278, %v421
      %v423 = vpop.f32.mrf.mxu0
      %424 = vdwg.mxu0
      %v425 = vmax.f32 %v351, 0.0
      %v426 = vmax.f32 %v353, 0.0
      %v427 = vmax.f32 %v422, 0.0
      %428 = vst [vmem:[%s170] sm:$0xff] %v425
      %429 = vst [vmem:[%s170 + $0x8] sm:$0xff] %v426
      %vm430 = vcmask 261120
      %431 = vst.msk [vmem:[%s170 + $0x10] sm:$0xff] %vm430, %v427
      %p432 = scmp.lt.s32.totalorder %s14, 1
      %s433 = scalar_select %p432, %s14, 1
      %s434 = smul.addr %s433, 3
      %s435 = smul.addr %s434, 8
      %s436 = scalar_lea.vmem %s3, %s435
      // Predicated region
      $region33: #{basic_conv2d.1} parent=31 // pred_check
        %p437 = pneg %p100
      $region34: #{basic_conv2d.1} parent=31 // pred_check_branch
        %439 = sbr.rel (%p437) target = $region36
      $region35: #{basic_conv2d.1} parent=31 // pred_region
        _
      $region36: #{basic_conv2d.1} parent=31 // pred_fallthru
        _
    $region32: #{basic_conv2d.1} parent=5 // pred_fallthru
      _
    %p440 = scmp.le.s32.totalorder 2, %s9
    // Predicated region
    $region37: #{basic_conv2d.1} parent=5 // pred_check
      %p441 = pneg %p440
    $region38: #{basic_conv2d.1} parent=5 // pred_check_branch
      %443 = sbr.rel (%p441) target = $region40
    $region39: #{basic_conv2d.1} parent=5 // pred_region
      %s444 = ssub.s32 %s9, 2
      // Predicated region
      $region41: #{basic_conv2d.1} parent=39 // pred_check
        %p445 = pneg %p106
      $region42: #{basic_conv2d.1} parent=39 // pred_check_branch
        %447 = sbr.rel (%p445) target = $region44
      $region43: #{basic_conv2d.1} parent=39 // pred_region
        %p448 = scmp.lt.s32.totalorder %s15, 1
        %s449 = scalar_select %p448, %s15, 1
        %s450 = smul.addr %s449, 3
        %s451 = smul.addr %s450, 8
        %s452 = scalar_lea.vmem %s3, %s451
      $region44: #{basic_conv2d.1} parent=39 // pred_fallthru
        _
    $region40: #{basic_conv2d.1} parent=5 // pred_fallthru
      _
  $region6: #{basic_conv2d.1} parent=0 // loop_footer
    %s13 = sadd.s32 1, %s9
  $region7: #{basic_conv2d.1} parent=0 // loop_footer_branch
    %8 = sbr.rel target = $region3
  $region8: #{basic_conv2d.1} parent=0 // loop_exit
    _

</llo_original>
